<compile_context>
chip_gen: v7x
topology: tpu7x:2x2x1
jax: 0.10.0
libtpu: 0.0.40
codegen_flags: <defaults>
</compile_context>

<pallas_src>
import numpy as np
import jax
import jax.numpy as jnp
from jax.experimental import pallas as pl
from jax.experimental.pallas import tpu as pltpu

EPS = 1e-6
LOG_SIG_CAP_MAX = 2.0
LOG_SIG_CAP_MIN = -20.0
LOG_2PI = float(np.log(2.0 * np.pi))
ROW = 16      # bf16 sublane packing -> row-tile granularity for the 16-bit output slab
LANE = 128


def _round_up(x, m):
    return (x + m - 1) // m * m


def _make_gmm_kernel(K, Da, slab_w, mm_dtype):
    """Kernel for one (TILE_N, ...) batch tile."""
    out_w = K * (2 * Da + 1)          # head: [log_w (K) | mu (K*Da) | log_sig (K*Da)]
    pack_w = out_w + 2 * Da + 2       # + actions | x_t | log_p hi | log_p lo

    def kernel(x_ref, w1_ref, b1_ref, w2_ref, b2_ref, w3_ref, b3_ref,
               noise_ref, out_ref):
        # ---- MLP hot path: three MXU matmuls (bf16 in / f32 acc), ReLU on VPU ----
        h1 = jnp.dot(x_ref[...], w1_ref[...],
                     preferred_element_type=jnp.float32) + b1_ref[...]
        h1 = jnp.maximum(h1, 0.0).astype(mm_dtype)
        h2 = jnp.dot(h1, w2_ref[...],
                     preferred_element_type=jnp.float32) + b2_ref[...]
        h2 = jnp.maximum(h2, 0.0).astype(mm_dtype)
        out = jnp.dot(h2, w3_ref[...],
                      preferred_element_type=jnp.float32) + b3_ref[...]

        # log_sig clip applied in place via a column-iota mask so the head block
        # [log_w | mu | log_sig] stays one contiguous slab piece (fewer concat pieces).
        col = jax.lax.broadcasted_iota(jnp.int32, out.shape, 1)
        is_ls = jnp.logical_and(col >= K + K * Da, col < out_w)
        head = jnp.where(is_ls,
                         jnp.clip(out, LOG_SIG_CAP_MIN, LOG_SIG_CAP_MAX), out)

        log_ws = head[:, :K]                                  # (n, K)
        mus = head[:, K:K + K * Da]                           # (n, K*Da), k-major
        log_sigs = head[:, K + K * Da:out_w]                  # (n, K*Da)
        n = log_ws.shape[0]

        gum = noise_ref[:, :K]                                # Gumbel noise
        eps = noise_ref[:, K:K + Da]                          # Normal noise

        # ---- categorical component choice via Gumbel-max (noise supplied) ----
        logits = log_ws + gum                                 # (n, K)
        mx = jnp.max(logits, axis=1, keepdims=True)
        iota_k = jax.lax.broadcasted_iota(jnp.int32, (n, K), 1)
        cand = jnp.where(logits >= mx, iota_k, K)
        zidx = jnp.min(cand, axis=1, keepdims=True)           # first argmax index
        onehot = (iota_k == zidx).astype(jnp.float32)         # (n, K)

        mu_sel = jnp.zeros((n, Da), jnp.float32)
        ls_sel = jnp.zeros((n, Da), jnp.float32)
        for k in range(K):
            sel = onehot[:, k:k + 1]
            mu_sel = mu_sel + sel * mus[:, k * Da:(k + 1) * Da]
            ls_sel = ls_sel + sel * log_sigs[:, k * Da:(k + 1) * Da]

        x_t = mu_sel + jnp.exp(ls_sel) * eps                  # (n, Da)

        # ---- log p(x_t): one wide elementwise pass + a block-diagonal matmul ----
        # The per-component sums (K groups of Da lanes) ride the MXU (slack slot)
        # instead of 2K narrow XLU reductions; accumulation stays f32.
        x_rep = jnp.concatenate([x_t] * K, axis=1)            # (n, K*Da)
        d = (x_rep - mus) * jnp.exp(-log_sigs)
        r_i = jax.lax.broadcasted_iota(jnp.int32, (K * Da, K), 0)
        c_i = jax.lax.broadcasted_iota(jnp.int32, (K * Da, K), 1)
        sel_mat = jnp.logical_and(r_i >= c_i * Da,
                                  r_i < (c_i + 1) * Da).astype(jnp.float32)
        quad = jnp.dot(d * d, sel_mat, preferred_element_type=jnp.float32)      # (n,K)
        sum_ls = jnp.dot(log_sigs, sel_mat, preferred_element_type=jnp.float32)  # (n,K)
        log_p_xz = -0.5 * quad - sum_ls - 0.5 * Da * LOG_2PI

        def lse(a):
            m = jnp.max(a, axis=1, keepdims=True)
            return m + jnp.log(jnp.sum(jnp.exp(a - m), axis=1, keepdims=True))

        log_p = lse(log_p_xz + log_ws) - lse(log_ws)          # (n, 1)
        actions = jnp.tanh(x_t)                               # EUP

        # ---- single lane-dense 16-bit packed output (halves HBM writeback) ----
        # log_p is kept near-f32 accurate via a hi/lo bf16 split.
        lp_hi = log_p.astype(jnp.bfloat16)
        lp_lo = (log_p - lp_hi.astype(jnp.float32)).astype(jnp.bfloat16)
        pieces = [head[:, :out_w].astype(jnp.bfloat16),
                  actions.astype(jnp.bfloat16),
                  x_t.astype(jnp.bfloat16),
                  lp_hi, lp_lo]
        if slab_w > pack_w:
            pieces.append(jnp.zeros((n, slab_w - pack_w), jnp.bfloat16))
        out_ref[...] = jnp.concatenate(pieces, axis=1)

    return kernel


def _prepare_params(params, K, Da, mm_dtype):
    """Pad hidden/head dims to 128-lane multiples and reorder the head columns
    to the grouped [log_w | mu | log_sig] layout. (In a training loop, cache this.)"""
    w1 = jnp.asarray(params["w1"], jnp.float32)
    b1 = jnp.asarray(params["b1"], jnp.float32).reshape(1, -1)
    w2 = jnp.asarray(params["w2"], jnp.float32)
    b2 = jnp.asarray(params["b2"], jnp.float32).reshape(1, -1)
    w3 = jnp.asarray(params["w3"], jnp.float32)
    b3 = jnp.asarray(params["b3"], jnp.float32).reshape(1, -1)

    Ds, H = w1.shape
    out_dim = w3.shape[1]
    P = 2 * Da + 1
    assert out_dim == K * P

    H_pad = _round_up(H, LANE)
    head_pad = _round_up(out_dim, LANE)

    # Gather map: grouped column j -> original column src[j]
    src = np.zeros(out_dim, np.int32)
    for k in range(K):
        src[k] = k * P                                                   # log_w_k
        src[K + k * Da:K + (k + 1) * Da] = k * P + 1 + np.arange(Da)     # mu_k
        src[K + K * Da + k * Da:K + K * Da + (k + 1) * Da] = (
            k * P + 1 + Da + np.arange(Da))                              # log_sig_k
    w3_re = w3[:, src]
    b3_re = b3[:, src]

    w1p = jnp.zeros((Ds, H_pad), jnp.float32).at[:, :H].set(w1)
    b1p = jnp.zeros((1, H_pad), jnp.float32).at[:, :H].set(b1)
    w2p = jnp.zeros((H_pad, H_pad), jnp.float32).at[:H, :H].set(w2)
    b2p = jnp.zeros((1, H_pad), jnp.float32).at[:, :H].set(b2)
    w3p = jnp.zeros((H_pad, head_pad), jnp.float32).at[:H, :out_dim].set(w3_re)
    b3p = jnp.zeros((1, head_pad), jnp.float32).at[:, :out_dim].set(b3_re)

    return dict(w1=w1p.astype(mm_dtype), b1=b1p,
                w2=w2p.astype(mm_dtype), b2=b2p,
                w3=w3p.astype(mm_dtype), b3=b3p,
                H_pad=H_pad, head_pad=head_pad)


def _vmem_bytes_estimate(tile_n, Ds, noise_w, H_pad, head_pad, slab_w, mm_bytes):
    """Rough scoped-VMEM footprint: double-buffered streamed tiles + weights (x2)
    + the live in-kernel temporaries."""
    lane = lambda w: _round_up(max(int(w), 1), LANE)
    stream = 2 * tile_n * (lane(Ds) * mm_bytes + lane(noise_w) * 4 + slab_w * 2)
    weights = 2 * ((lane(Ds) * H_pad + H_pad * H_pad + H_pad * head_pad) * mm_bytes
                   + (2 * H_pad + head_pad) * 4)
    temps = tile_n * (2 * H_pad * (4 + mm_bytes) + 2 * head_pad * 4 + 8 * LANE * 4)
    return int(stream + weights + temps)


def gmm_skill_policy_forward(params, observations, skills, gumbel, eps, *,
                             K, Da, reg=1e-3, squash=True,
                             tile_n=1024, use_bf16=True):
    """Glue: concat obs+skills, pad/tile the batch, call the Pallas kernel,
    repackage the torch-module outputs.

    tile_n guidance:
      * v5e : 1024-2048 (the 16 MiB scoped-VMEM default is raised explicitly below).
      * v6e : 1024-2048.
      * v7x : <= 2048 (64 MiB VMEM per TensorCore); the wrapper also splits the grid
              into >= 2 steps whenever possible so both TensorCores get work.
    """
    mm_dtype = jnp.bfloat16 if use_bf16 else jnp.float32
    mm_bytes = 2 if use_bf16 else 4

    x = jnp.concatenate([observations, skills], axis=1).astype(jnp.float32)
    N, Ds = x.shape

    p = _prepare_params(params, K, Da, mm_dtype)
    H_pad, head_pad = p["H_pad"], p["head_pad"]

    out_w = K * (2 * Da + 1)
    pack_w = out_w + 2 * Da + 2
    slab_w = _round_up(pack_w, LANE)          # lane-dense bf16 slab width
    noise_w = K + Da

    # --- batch tiling (rows aligned to the bf16 sublane packing of 16) ---
    tile_n = max(ROW, _round_up(int(tile_n), ROW))
    N_row = _round_up(N, ROW)
    TILE_N = min(tile_n, N_row)
    # v7x shards the "parallel" grid axis across its 2 TensorCores: keep >= 2 steps
    # whenever the batch allows it so one core is not idle.
    if N_row // TILE_N < 2 and N_row >= 2 * ROW:
        TILE_N = _round_up(pl.cdiv(N_row, 2), ROW)
    N_pad = _round_up(N_row, TILE_N)
    grid = (N_pad // TILE_N,)

    def pad_rows(a):
        return a if a.shape[0] == N_pad else jnp.pad(a, ((0, N_pad - a.shape[0]), (0, 0)))

    x_in = pad_rows(x).astype(mm_dtype)
    # One merged noise stream (one DMA descriptor/semaphore per step instead of two).
    # TODO(synk): the torch module draws this internally (Categorical/Normal); it is
    # passed in explicitly here (in-kernel pltpu.prng_* would change RNG semantics).
    noise = jnp.concatenate([jnp.asarray(gumbel, jnp.float32),
                             jnp.asarray(eps, jnp.float32)], axis=1)
    noise_in = pad_rows(noise)

    kernel = _make_gmm_kernel(K, Da, slab_w, mm_dtype)

    def row_spec(w):
        return pl.BlockSpec((TILE_N, w), lambda i: (i, 0))

    def const_spec(r, c):
        # Constant index_map -> block fetched once, stays VMEM-resident across steps.
        # Default double-buffering kept (duplicate weight footprint is small).
        return pl.BlockSpec((r, c), lambda i: (0, 0))

    # Scoped VMEM budget derived from the actual footprint (v5e default is only 16 MiB;
    # capped at 64 MiB so the request is valid on v7x's smaller per-core VMEM).
    vmem_est = _vmem_bytes_estimate(TILE_N, Ds, noise_w, H_pad, head_pad, slab_w, mm_bytes)
    vmem_limit = int(min(64 << 20, max(32 << 20, int(1.5 * vmem_est))))

    flops = int(2 * N_pad * (Ds * H_pad + H_pad * H_pad + H_pad * head_pad
                             + 2 * K * Da * K))
    transcendentals = int(N_pad * (K * Da + 3 * Da + 2 * K + 2))
    bytes_accessed = int(N_pad * (Ds * mm_bytes + noise_w * 4 + slab_w * 2)
                         + (Ds * H_pad + H_pad * H_pad + H_pad * head_pad) * mm_bytes
                         + (2 * H_pad + head_pad) * 4)

    slab = pl.pallas_call(
        kernel,
        out_shape=jax.ShapeDtypeStruct((N_pad, slab_w), jnp.bfloat16),
        grid=grid,
        in_specs=[
            row_spec(Ds),                                          # x
            const_spec(Ds, H_pad), const_spec(1, H_pad),           # w1, b1
            const_spec(H_pad, H_pad), const_spec(1, H_pad),        # w2, b2
            const_spec(H_pad, head_pad), const_spec(1, head_pad),  # w3, b3
            row_spec(noise_w),                                     # [gumbel | eps]
        ],
        out_specs=row_spec(slab_w),
        compiler_params=pltpu.CompilerParams(
            dimension_semantics=("parallel",),
            vmem_limit_bytes=vmem_limit),
        cost_estimate=pl.CostEstimate(flops=flops,
                                      transcendentals=transcendentals,
                                      bytes_accessed=bytes_accessed),
    )(x_in, p["w1"], p["b1"], p["w2"], p["b2"], p["w3"], p["b3"], noise_in)

    slab = slab[:N].astype(jnp.float32)       # bf16 -> f32 cast is exact
    head = slab[:, :out_w]
    log_ws = head[:, :K]
    mus = head[:, K:K + K * Da]
    log_sigs = head[:, K + K * Da:out_w]
    o = out_w
    actions = slab[:, o:o + Da]; o += Da
    x_t = slab[:, o:o + Da]; o += Da
    log_p = slab[:, o] + slab[:, o + 1]       # hi/lo recombine (~f32 precision)

    # Batch-wide mean -> computed here so batch tiling cannot change its value.
    reg_loss = reg * 0.5 * (jnp.mean(log_sigs * log_sigs) + jnp.mean(mus * mus))

    if not squash:
        actions = x_t
    info = dict(
        log_p_x_t=log_p,
        reg_loss_t=reg_loss,
        x_t=x_t,
        log_ws_t=log_ws,
        mus_t=mus.reshape(N, K, Da),
        log_sigs_t=log_sigs.reshape(N, K, Da),
    )
    return actions, info


def _reference_forward(params, observations, skills, gumbel, eps, *,
                       K, Da, reg=1e-3, mm_dtype=jnp.float32):
    """Pure-JAX reference (mm_dtype controls matmul input precision)."""
    x = jnp.concatenate([observations, skills], axis=1).astype(jnp.float32)
    N = x.shape[0]

    def mm(a, w):
        return jnp.dot(a.astype(mm_dtype), jnp.asarray(w).astype(mm_dtype),
                       preferred_element_type=jnp.float32)

    h1 = jnp.maximum(mm(x, params["w1"]) + params["b1"], 0.0)
    h2 = jnp.maximum(mm(h1, params["w2"]) + params["b2"], 0.0)
    out = (mm(h2, params["w3"]) + params["b3"]).reshape(N, K, 2 * Da + 1)
    log_ws = out[..., 0]
    mus = out[..., 1:1 + Da]
    log_sigs = jnp.clip(out[..., 1 + Da:], LOG_SIG_CAP_MIN, LOG_SIG_CAP_MAX)
    z = jnp.argmax(log_ws + gumbel, axis=1)
    mu_sel = jnp.take_along_axis(mus, z[:, None, None], axis=1)[:, 0]
    ls_sel = jnp.take_along_axis(log_sigs, z[:, None, None], axis=1)[:, 0]
    x_t = mu_sel + jnp.exp(ls_sel) * eps
    d = (x_t[:, None, :] - mus) * jnp.exp(-log_sigs)
    logp_comp = (-0.5 * jnp.sum(d * d, axis=-1) - jnp.sum(log_sigs, axis=-1)
                 - 0.5 * Da * LOG_2PI)
    log_p = (jax.scipy.special.logsumexp(logp_comp + log_ws, axis=1)
             - jax.scipy.special.logsumexp(log_ws, axis=1))
    reg_loss = reg * 0.5 * (jnp.mean(log_sigs ** 2) + jnp.mean(mus ** 2))
    return jnp.tanh(x_t), x_t, log_p, reg_loss, log_ws, mus, log_sigs


if __name__ == "__main__":
    # Small, module-consistent shapes.
    N = 2            # batch
    obs_dim = 12
    skills_num = 4
    Ds = obs_dim + skills_num   # MLP input dim
    Da = 6                      # action flat_dim
    K = 2                       # mixture components (module default)
    H = 32                      # hidden size (small; module default 256)
    reg = 1e-3

    key = jax.random.PRNGKey(0)
    k_w1, k_w2, k_w3, k_obs, k_sk, k_gum, k_eps = jax.random.split(key, 7)

    def glorot(k, fan_in, fan_out):
        lim = float(np.sqrt(6.0 / (fan_in + fan_out)))
        return jax.random.uniform(k, (fan_in, fan_out), jnp.float32, -lim, lim)

    out_dim = K * (2 * Da + 1)
    params = {
        "w1": glorot(k_w1, Ds, H), "b1": jnp.zeros((1, H), jnp.float32),
        "w2": glorot(k_w2, H, H),  "b2": jnp.zeros((1, H), jnp.float32),
        "w3": glorot(k_w3, H, out_dim), "b3": jnp.zeros((1, out_dim), jnp.float32),
    }

    observations = jax.random.normal(k_obs, (N, obs_dim), jnp.float32)
    skills = jax.nn.one_hot(jnp.array([0, 2]), skills_num, dtype=jnp.float32)

    # Deterministic sampling noise (Gumbel for component choice, normal for x).
    u = jax.random.uniform(k_gum, (N, K), jnp.float32, 1e-6, 1.0 - 1e-6)
    gumbel = -jnp.log(-jnp.log(u))
    eps = jax.random.normal(k_eps, (N, Da), jnp.float32)

    actions, info = gmm_skill_policy_forward(
        params, observations, skills, gumbel, eps,
        K=K, Da=Da, reg=reg, squash=True, tile_n=1024, use_bf16=True)
    jax.block_until_ready(actions)
    jax.block_until_ready(info["log_p_x_t"])

    # --- correctness: check against a bf16-matmul-matched reference ---
    r_act, r_xt, r_logp, r_reg, r_logw, r_mu, r_ls = _reference_forward(
        params, observations, skills, gumbel, eps,
        K=K, Da=Da, reg=reg, mm_dtype=jnp.bfloat16)

    # Quantities stored in the bf16 output slab: allow ~1 bf16 ulp (0.78%).
    STORE = dict(rtol=8e-3, atol=8e-3)
    np.testing.assert_allclose(np.asarray(actions), np.asarray(r_act), **STORE)
    np.testing.assert_allclose(np.asarray(info["x_t"]), np.asarray(r_xt), **STORE)
    np.testing.assert_allclose(np.asarray(info["log_ws_t"]), np.asarray(r_logw), **STORE)
    np.testing.assert_allclose(np.asarray(info["mus_t"]).reshape(N, -1),
                               np.asarray(r_mu).reshape(N, -1), **STORE)
    np.testing.assert_allclose(np.asarray(info["log_sigs_t"]).reshape(N, -1),
                               np.asarray(r_ls).reshape(N, -1), **STORE)
    # log_p rides the hi/lo split at ~f32 precision -> tight check.
    np.testing.assert_allclose(np.asarray(info["log_p_x_t"]), np.asarray(r_logp),
                               rtol=3e-3, atol=3e-3)
    # reg_loss is computed from the bf16-stored mus/log_sigs -> small relative slack.
    np.testing.assert_allclose(float(info["reg_loss_t"]), float(r_reg), rtol=2e-2)

    # --- precision sanity vs full-f32 reference (selection-independent quantities) ---
    f_act, f_xt, f_logp, f_reg, f_logw, f_mu, f_ls = _reference_forward(
        params, observations, skills, gumbel, eps,
        K=K, Da=Da, reg=reg, mm_dtype=jnp.float32)
    np.testing.assert_allclose(np.asarray(info["log_ws_t"]), np.asarray(f_logw),
                               rtol=5e-2, atol=5e-2)
    np.testing.assert_allclose(np.asarray(info["mus_t"]).reshape(N, -1),
                               np.asarray(f_mu).reshape(N, -1), rtol=5e-2, atol=5e-2)
    np.testing.assert_allclose(np.asarray(info["log_sigs_t"]).reshape(N, -1),
                               np.asarray(f_ls).reshape(N, -1), rtol=5e-2, atol=5e-2)

    print("KERNEL_OK")
</pallas_src>

<mosaic_0001>
module attributes {stable_mosaic.version = 11 : i64} {
  func.func @kernel(%arg0: i32, %arg1: memref<16x16xbf16, #tpu.memory_space<vmem>>, %arg2: memref<16x128xbf16, #tpu.memory_space<vmem>>, %arg3: memref<1x128xf32, #tpu.memory_space<vmem>>, %arg4: memref<128x128xbf16, #tpu.memory_space<vmem>>, %arg5: memref<1x128xf32, #tpu.memory_space<vmem>>, %arg6: memref<128x128xbf16, #tpu.memory_space<vmem>>, %arg7: memref<1x128xf32, #tpu.memory_space<vmem>>, %arg8: memref<16x8xf32, #tpu.memory_space<vmem>>, %arg9: memref<16x128xbf16, #tpu.memory_space<vmem>>) attributes {dimension_semantics = [#tpu.dimension_semantics<parallel>], iteration_bounds = array<i64: 1>, scalar_prefetch = 0 : i64, scratch_operands = 0 : i64, tpu.core_type = #tpu.core_type<tc>, window_params = [{transform_indices = @transform_0, window_bounds = array<i64: 16, 16>}, {pipeline_mode = #tpu.pipeline_mode<synchronous>, transform_indices = @transform_1, window_bounds = array<i64: 16, 128>}, {pipeline_mode = #tpu.pipeline_mode<synchronous>, transform_indices = @transform_2, window_bounds = array<i64: 1, 128>}, {pipeline_mode = #tpu.pipeline_mode<synchronous>, transform_indices = @transform_3, window_bounds = array<i64: 128, 128>}, {pipeline_mode = #tpu.pipeline_mode<synchronous>, transform_indices = @transform_4, window_bounds = array<i64: 1, 128>}, {pipeline_mode = #tpu.pipeline_mode<synchronous>, transform_indices = @transform_5, window_bounds = array<i64: 128, 128>}, {pipeline_mode = #tpu.pipeline_mode<synchronous>, transform_indices = @transform_6, window_bounds = array<i64: 1, 128>}, {transform_indices = @transform_7, window_bounds = array<i64: 16, 8>}, {transform_indices = @transform_8, window_bounds = array<i64: 16, 128>}]} {
    %c0 = arith.constant 0 : index
    %c0_0 = arith.constant 0 : index
    %0 = vector.load %arg1[%c0, %c0_0] : memref<16x16xbf16, #tpu.memory_space<vmem>>, vector<16x16xbf16>
    %c0_1 = arith.constant 0 : index
    %c0_2 = arith.constant 0 : index
    %1 = vector.load %arg2[%c0_1, %c0_2] : memref<16x128xbf16, #tpu.memory_space<vmem>>, vector<16x128xbf16>
    %cst = arith.constant dense<0.000000e+00> : vector<16x128xf32>
    %2 = tpu.matmul %0, %1, %cst {dimension_numbers = #tpu.dot_dimension_numbers<[1], [0], [0], [1], [0, 0, 1, 1], [], []>} : vector<16x16xbf16>, vector<16x128xbf16>, vector<16x128xf32> -> vector<16x128xf32>
    %c0_3 = arith.constant 0 : index
    %c0_4 = arith.constant 0 : index
    %3 = vector.load %arg3[%c0_3, %c0_4] : memref<1x128xf32, #tpu.memory_space<vmem>>, vector<1x128xf32>
    %4 = vector.broadcast %3 : vector<1x128xf32> to vector<16x128xf32>
    %5 = arith.addf %2, %4 : vector<16x128xf32>
    %cst_5 = arith.constant 0.000000e+00 : f32
    %6 = vector.broadcast %cst_5 : f32 to vector<16x128xf32>
    %7 = arith.maximumf %5, %6 : vector<16x128xf32>
    %8 = arith.truncf %7 : vector<16x128xf32> to vector<16x128xbf16>
    %c0_6 = arith.constant 0 : index
    %c0_7 = arith.constant 0 : index
    %9 = vector.load %arg4[%c0_6, %c0_7] : memref<128x128xbf16, #tpu.memory_space<vmem>>, vector<128x128xbf16>
    %cst_8 = arith.constant dense<0.000000e+00> : vector<16x128xf32>
    %10 = tpu.matmul %8, %9, %cst_8 {dimension_numbers = #tpu.dot_dimension_numbers<[1], [0], [0], [1], [0, 0, 1, 1], [], []>} : vector<16x128xbf16>, vector<128x128xbf16>, vector<16x128xf32> -> vector<16x128xf32>
    %c0_9 = arith.constant 0 : index
    %c0_10 = arith.constant 0 : index
    %11 = vector.load %arg5[%c0_9, %c0_10] : memref<1x128xf32, #tpu.memory_space<vmem>>, vector<1x128xf32>
    %12 = vector.broadcast %11 : vector<1x128xf32> to vector<16x128xf32>
    %13 = arith.addf %10, %12 : vector<16x128xf32>
    %cst_11 = arith.constant 0.000000e+00 : f32
    %14 = vector.broadcast %cst_11 : f32 to vector<16x128xf32>
    %15 = arith.maximumf %13, %14 : vector<16x128xf32>
    %16 = arith.truncf %15 : vector<16x128xf32> to vector<16x128xbf16>
    %c0_12 = arith.constant 0 : index
    %c0_13 = arith.constant 0 : index
    %17 = vector.load %arg6[%c0_12, %c0_13] : memref<128x128xbf16, #tpu.memory_space<vmem>>, vector<128x128xbf16>
    %cst_14 = arith.constant dense<0.000000e+00> : vector<16x128xf32>
    %18 = tpu.matmul %16, %17, %cst_14 {dimension_numbers = #tpu.dot_dimension_numbers<[1], [0], [0], [1], [0, 0, 1, 1], [], []>} : vector<16x128xbf16>, vector<128x128xbf16>, vector<16x128xf32> -> vector<16x128xf32>
    %c0_15 = arith.constant 0 : index
    %c0_16 = arith.constant 0 : index
    %19 = vector.load %arg7[%c0_15, %c0_16] : memref<1x128xf32, #tpu.memory_space<vmem>>, vector<1x128xf32>
    %20 = vector.broadcast %19 : vector<1x128xf32> to vector<16x128xf32>
    %21 = arith.addf %18, %20 : vector<16x128xf32>
    %22 = tpu.iota {dimensions = array<i32: 1>} : vector<16x128xi32>
    %c14_i32 = arith.constant 14 : i32
    %23 = vector.broadcast %c14_i32 : i32 to vector<16x128xi32>
    %24 = arith.cmpi sge, %22, %23 : vector<16x128xi32>
    %c26_i32 = arith.constant 26 : i32
    %25 = vector.broadcast %c26_i32 : i32 to vector<16x128xi32>
    %26 = arith.cmpi slt, %22, %25 : vector<16x128xi32>
    %27 = arith.andi %24, %26 : vector<16x128xi1>
    %cst_17 = arith.constant -2.000000e+01 : f32
    %cst_18 = arith.constant 2.000000e+00 : f32
    %28 = vector.broadcast %cst_17 : f32 to vector<16x128xf32>
    %29 = arith.maximumf %28, %21 : vector<16x128xf32>
    %30 = vector.broadcast %cst_18 : f32 to vector<16x128xf32>
    %31 = arith.minimumf %30, %29 : vector<16x128xf32>
    %32 = arith.select %27, %31, %21 : vector<16x128xi1>, vector<16x128xf32>
    %33 = vector.extract_strided_slice %32 {offsets = [0, 0], sizes = [16, 2], strides = [1, 1]} : vector<16x128xf32> to vector<16x2xf32>
    %34 = vector.extract_strided_slice %32 {offsets = [0, 2], sizes = [16, 12], strides = [1, 1]} : vector<16x128xf32> to vector<16x12xf32>
    %35 = vector.extract_strided_slice %32 {offsets = [0, 14], sizes = [16, 12], strides = [1, 1]} : vector<16x128xf32> to vector<16x12xf32>
    %c0_19 = arith.constant 0 : index
    %c0_20 = arith.constant 0 : index
    %36 = vector.load %arg8[%c0_19, %c0_20] : memref<16x8xf32, #tpu.memory_space<vmem>>, vector<16x2xf32>
    %c0_21 = arith.constant 0 : index
    %c2 = arith.constant 2 : index
    %37 = vector.load %arg8[%c0_21, %c2] : memref<16x8xf32, #tpu.memory_space<vmem>>, vector<16x6xf32>
    %38 = arith.addf %33, %36 : vector<16x2xf32>
    %cst_22 = arith.constant dense<0xFF800000> : vector<16xf32>
    %39 = vector.multi_reduction <maximumf>, %38, %cst_22 [1] : vector<16x2xf32> to vector<16xf32>
    %40 = vector.shape_cast %39 : vector<16xf32> to vector<16x1xf32>
    %41 = tpu.iota {dimensions = array<i32: 1>} : vector<16x2xi32>
    %42 = vector.broadcast %40 : vector<16x1xf32> to vector<16x2xf32>
    %43 = arith.cmpf oge, %38, %42 : vector<16x2xf32>
    %c2_i32 = arith.constant 2 : i32
    %44 = vector.broadcast %c2_i32 : i32 to vector<16x2xi32>
    %45 = arith.select %43, %41, %44 : vector<16x2xi1>, vector<16x2xi32>
    %cst_23 = arith.constant dense<2147483647> : vector<16xi32>
    %46 = vector.multi_reduction <minsi>, %45, %cst_23 [1] : vector<16x2xi32> to vector<16xi32>
    %47 = vector.shape_cast %46 : vector<16xi32> to vector<16x1xi32>
    %48 = vector.broadcast %47 : vector<16x1xi32> to vector<16x2xi32>
    %49 = arith.cmpi eq, %41, %48 : vector<16x2xi32>
    %50 = arith.extui %49 : vector<16x2xi1> to vector<16x2xi32>
    %51 = arith.sitofp %50 : vector<16x2xi32> to vector<16x2xf32>
    %cst_24 = arith.constant 0.000000e+00 : f32
    %52 = vector.broadcast %cst_24 : f32 to vector<16x6xf32>
    %cst_25 = arith.constant 0.000000e+00 : f32
    %53 = vector.broadcast %cst_25 : f32 to vector<16x6xf32>
    %54 = vector.extract_strided_slice %51 {offsets = [0, 0], sizes = [16, 1], strides = [1, 1]} : vector<16x2xf32> to vector<16x1xf32>
    %55 = vector.extract_strided_slice %34 {offsets = [0, 0], sizes = [16, 6], strides = [1, 1]} : vector<16x12xf32> to vector<16x6xf32>
    %56 = vector.broadcast %54 : vector<16x1xf32> to vector<16x6xf32>
    %57 = arith.mulf %56, %55 : vector<16x6xf32>
    %58 = arith.addf %52, %57 : vector<16x6xf32>
    %59 = vector.extract_strided_slice %35 {offsets = [0, 0], sizes = [16, 6], strides = [1, 1]} : vector<16x12xf32> to vector<16x6xf32>
    %60 = vector.broadcast %54 : vector<16x1xf32> to vector<16x6xf32>
    %61 = arith.mulf %60, %59 : vector<16x6xf32>
    %62 = arith.addf %53, %61 : vector<16x6xf32>
    %63 = vector.extract_strided_slice %51 {offsets = [0, 1], sizes = [16, 1], strides = [1, 1]} : vector<16x2xf32> to vector<16x1xf32>
    %64 = vector.extract_strided_slice %34 {offsets = [0, 6], sizes = [16, 6], strides = [1, 1]} : vector<16x12xf32> to vector<16x6xf32>
    %65 = vector.broadcast %63 : vector<16x1xf32> to vector<16x6xf32>
    %66 = arith.mulf %65, %64 : vector<16x6xf32>
    %67 = arith.addf %58, %66 : vector<16x6xf32>
    %68 = vector.extract_strided_slice %35 {offsets = [0, 6], sizes = [16, 6], strides = [1, 1]} : vector<16x12xf32> to vector<16x6xf32>
    %69 = vector.broadcast %63 : vector<16x1xf32> to vector<16x6xf32>
    %70 = arith.mulf %69, %68 : vector<16x6xf32>
    %71 = arith.addf %62, %70 : vector<16x6xf32>
    %72 = math.exp %71 : vector<16x6xf32>
    %73 = arith.mulf %72, %37 : vector<16x6xf32>
    %74 = arith.addf %67, %73 : vector<16x6xf32>
    %75 = tpu.concatenate %74, %74 in 1 : vector<16x6xf32>, vector<16x6xf32> -> vector<16x12xf32>
    %76 = arith.subf %75, %34 : vector<16x12xf32>
    %cst_26 = arith.constant 0.000000e+00 : f32
    %77 = vector.broadcast %cst_26 : f32 to vector<16x12xf32>
    %78 = arith.subf %77, %35 : vector<16x12xf32>
    %79 = math.exp %78 : vector<16x12xf32>
    %80 = arith.mulf %76, %79 : vector<16x12xf32>
    %81 = tpu.iota {dimensions = array<i32: 0>} : vector<12x2xi32>
    %82 = tpu.iota {dimensions = array<i32: 1>} : vector<12x2xi32>
    %c6_i32 = arith.constant 6 : i32
    %83 = vector.broadcast %c6_i32 : i32 to vector<12x2xi32>
    %84 = arith.muli %82, %83 : vector<12x2xi32>
    %85 = arith.cmpi sge, %81, %84 : vector<12x2xi32>
    %c1_i32 = arith.constant 1 : i32
    %86 = vector.broadcast %c1_i32 : i32 to vector<12x2xi32>
    %87 = arith.addi %82, %86 : vector<12x2xi32>
    %c6_i32_27 = arith.constant 6 : i32
    %88 = vector.broadcast %c6_i32_27 : i32 to vector<12x2xi32>
    %89 = arith.muli %87, %88 : vector<12x2xi32>
    %90 = arith.cmpi slt, %81, %89 : vector<12x2xi32>
    %91 = arith.andi %85, %90 : vector<12x2xi1>
    %92 = arith.extui %91 : vector<12x2xi1> to vector<12x2xi32>
    %93 = arith.sitofp %92 : vector<12x2xi32> to vector<12x2xf32>
    %94 = arith.mulf %80, %80 : vector<16x12xf32>
    %cst_28 = arith.constant dense<0.000000e+00> : vector<16x2xf32>
    %95 = tpu.matmul %94, %93, %cst_28 {dimension_numbers = #tpu.dot_dimension_numbers<[1], [0], [0], [1], [0, 0, 1, 1], [], []>} : vector<16x12xf32>, vector<12x2xf32>, vector<16x2xf32> -> vector<16x2xf32>
    %cst_29 = arith.constant dense<0.000000e+00> : vector<16x2xf32>
    %96 = tpu.matmul %35, %93, %cst_29 {dimension_numbers = #tpu.dot_dimension_numbers<[1], [0], [0], [1], [0, 0, 1, 1], [], []>} : vector<16x12xf32>, vector<12x2xf32>, vector<16x2xf32> -> vector<16x2xf32>
    %cst_30 = arith.constant -5.000000e-01 : f32
    %97 = vector.broadcast %cst_30 : f32 to vector<16x2xf32>
    %98 = arith.mulf %97, %95 : vector<16x2xf32>
    %99 = arith.subf %98, %96 : vector<16x2xf32>
    %cst_31 = arith.constant 5.51363134 : f32
    %100 = vector.broadcast %cst_31 : f32 to vector<16x2xf32>
    %101 = arith.subf %99, %100 : vector<16x2xf32>
    %102 = arith.addf %101, %33 : vector<16x2xf32>
    %cst_32 = arith.constant dense<0xFF800000> : vector<16xf32>
    %103 = vector.multi_reduction <maximumf>, %102, %cst_32 [1] : vector<16x2xf32> to vector<16xf32>
    %104 = vector.shape_cast %103 : vector<16xf32> to vector<16x1xf32>
    %105 = vector.broadcast %104 : vector<16x1xf32> to vector<16x2xf32>
    %106 = arith.subf %102, %105 : vector<16x2xf32>
    %107 = math.exp %106 : vector<16x2xf32>
    %cst_33 = arith.constant dense<0.000000e+00> : vector<16xf32>
    %108 = vector.multi_reduction <add>, %107, %cst_33 [1] : vector<16x2xf32> to vector<16xf32>
    %109 = vector.shape_cast %108 : vector<16xf32> to vector<16x1xf32>
    %110 = math.log %109 : vector<16x1xf32>
    %111 = arith.addf %104, %110 : vector<16x1xf32>
    %cst_34 = arith.constant dense<0xFF800000> : vector<16xf32>
    %112 = vector.multi_reduction <maximumf>, %33, %cst_34 [1] : vector<16x2xf32> to vector<16xf32>
    %113 = vector.shape_cast %112 : vector<16xf32> to vector<16x1xf32>
    %114 = vector.broadcast %113 : vector<16x1xf32> to vector<16x2xf32>
    %115 = arith.subf %33, %114 : vector<16x2xf32>
    %116 = math.exp %115 : vector<16x2xf32>
    %cst_35 = arith.constant dense<0.000000e+00> : vector<16xf32>
    %117 = vector.multi_reduction <add>, %116, %cst_35 [1] : vector<16x2xf32> to vector<16xf32>
    %118 = vector.shape_cast %117 : vector<16xf32> to vector<16x1xf32>
    %119 = math.log %118 : vector<16x1xf32>
    %120 = arith.addf %113, %119 : vector<16x1xf32>
    %121 = arith.subf %111, %120 : vector<16x1xf32>
    %122 = math.tanh %74 : vector<16x6xf32>
    %123 = arith.truncf %121 : vector<16x1xf32> to vector<16x1xbf16>
    %124 = arith.extf %123 : vector<16x1xbf16> to vector<16x1xf32>
    %125 = arith.subf %121, %124 : vector<16x1xf32>
    %126 = arith.truncf %125 : vector<16x1xf32> to vector<16x1xbf16>
    %127 = vector.extract_strided_slice %32 {offsets = [0, 0], sizes = [16, 26], strides = [1, 1]} : vector<16x128xf32> to vector<16x26xf32>
    %128 = arith.truncf %127 : vector<16x26xf32> to vector<16x26xbf16>
    %129 = arith.truncf %122 : vector<16x6xf32> to vector<16x6xbf16>
    %130 = arith.truncf %74 : vector<16x6xf32> to vector<16x6xbf16>
    %cst_36 = arith.constant 0.000000e+00 : bf16
    %131 = vector.broadcast %cst_36 : bf16 to vector<16x88xbf16>
    %132 = tpu.concatenate %128, %129, %130, %123, %126, %131 in 1 : vector<16x26xbf16>, vector<16x6xbf16>, vector<16x6xbf16>, vector<16x1xbf16>, vector<16x1xbf16>, vector<16x88xbf16> -> vector<16x128xbf16>
    %c0_37 = arith.constant 0 : index
    %c0_38 = arith.constant 0 : index
    %133 = vector.load %arg9[%c0_37, %c0_38] : memref<16x128xbf16, #tpu.memory_space<vmem>>, vector<16x128xbf16>
    tpu.vector_store %arg9[%c0_37, %c0_38], %132 {strides = array<i32>} : memref<16x128xbf16, #tpu.memory_space<vmem>>, vector<16x128xbf16>,
    return
  }
  func.func @transform_0(%arg0: i32) -> (i32, i32) {
    %c0_i32 = arith.constant 0 : i32
    %c0_i32_0 = arith.constant 0 : i32
    return %arg0, %c0_i32 : i32, i32
  }
  func.func @transform_1(%arg0: i32) -> (i32, i32) {
    %c0_i32 = arith.constant 0 : i32
    %c0_i32_0 = arith.constant 0 : i32
    %c0_i32_1 = arith.constant 0 : i32
    return %c0_i32, %c0_i32_0 : i32, i32
  }
  func.func @transform_2(%arg0: i32) -> (i32, i32) {
    %c0_i32 = arith.constant 0 : i32
    %c0_i32_0 = arith.constant 0 : i32
    %c0_i32_1 = arith.constant 0 : i32
    return %c0_i32, %c0_i32_0 : i32, i32
  }
  func.func @transform_3(%arg0: i32) -> (i32, i32) {
    %c0_i32 = arith.constant 0 : i32
    %c0_i32_0 = arith.constant 0 : i32
    %c0_i32_1 = arith.constant 0 : i32
    return %c0_i32, %c0_i32_0 : i32, i32
  }
  func.func @transform_4(%arg0: i32) -> (i32, i32) {
    %c0_i32 = arith.constant 0 : i32
    %c0_i32_0 = arith.constant 0 : i32
    %c0_i32_1 = arith.constant 0 : i32
    return %c0_i32, %c0_i32_0 : i32, i32
  }
  func.func @transform_5(%arg0: i32) -> (i32, i32) {
    %c0_i32 = arith.constant 0 : i32
    %c0_i32_0 = arith.constant 0 : i32
    %c0_i32_1 = arith.constant 0 : i32
    return %c0_i32, %c0_i32_0 : i32, i32
  }
  func.func @transform_6(%arg0: i32) -> (i32, i32) {
    %c0_i32 = arith.constant 0 : i32
    %c0_i32_0 = arith.constant 0 : i32
    %c0_i32_1 = arith.constant 0 : i32
    return %c0_i32, %c0_i32_0 : i32, i32
  }
  func.func @transform_7(%arg0: i32) -> (i32, i32) {
    %c0_i32 = arith.constant 0 : i32
    %c0_i32_0 = arith.constant 0 : i32
    return %arg0, %c0_i32 : i32, i32
  }
  func.func @transform_8(%arg0: i32) -> (i32, i32) {
    %c0_i32 = arith.constant 0 : i32
    %c0_i32_0 = arith.constant 0 : i32
    return %arg0, %c0_i32 : i32, i32
  }
}

</mosaic_0001>

<llo_original>
// kernel: tpu_custom_call.1
$region0: #{tpu_custom_call.1}
  #allocation0 [shape = 'u32[]', space=smem, size = 0x4, offset = 0x4, fixed_abs, tag = 'smem constant byte address 0x4 - core index']
  #allocation1 [shape = 'u32[144,128]{1,0:T(1,128)}', space=vmem, size = 0x12000, scoped, tag = 'internal scratch']
  %s0 = inlined_call_operand.vmem [shape: bf16[16,16], index: 0, kind: input, shape index: {}]
  %s1 = inlined_call_operand.vmem [shape: bf16[16,128], index: 1, kind: input, shape index: {}]
  %s2 = inlined_call_operand.vmem [shape: f32[1,128], index: 2, kind: input, shape index: {}]
  %s3 = inlined_call_operand.hbm [shape: bf16[128,128], index: 3, kind: input, shape index: {}]
  %s4 = inlined_call_operand.vmem [shape: f32[1,128], index: 4, kind: input, shape index: {}]
  %s5 = inlined_call_operand.hbm [shape: bf16[128,128], index: 5, kind: input, shape index: {}]
  %s6 = inlined_call_operand.vmem [shape: f32[1,128], index: 6, kind: input, shape index: {}]
  %s7 = inlined_call_operand.vmem [shape: f32[16,8], index: 7, kind: input, shape index: {}]
  %s8 = inlined_call_operand.hbm [shape: bf16[16,128], index: 8, kind: output, shape index: {}]
  %s9 = sld [smem:[#allocation0]]
  $region50: #{tpu_custom_call.1} parent=0
    _
  %s11 = ssub.s32 1, %s9
  %s12 = scalar_select 0, %s11, %s9
  $region1: #{tpu_custom_call.1} parent=0
    #allocation2 [shape = 'u8[32768]{0}', space=vmem, size = 0x8000, scoped, tag = 'input window, operand 3, single buffered']
    #allocation3 [shape = 's32[1]{0}', space=sflag, size = 0x4, scoped, tag = 'scoped memory for tpu_custom_call.1']
    #allocation4 [shape = 's32[1]{0}', space=sflag, size = 0x4, scoped, tag = 'scoped memory for tpu_custom_call.1']
    #allocation5 [shape = 'u8[32768]{0}', space=vmem, size = 0x8000, scoped, tag = 'input window, operand 5, single buffered']
    #allocation6 [shape = 's32[1]{0}', space=sflag, size = 0x4, scoped, tag = 'scoped memory for tpu_custom_call.1']
    #allocation7 [shape = 'u8[4096]{0}', space=vmem, size = 0x1000, scoped, tag = 'output window, operand 0, single buffered']
    %13 = vsyncpa [#allocation3], 0
    %14 = vsyncpa [#allocation6], 0
    %15 = vsyncpa [#allocation4], 0
    // Predicated region
    $region2: #{tpu_custom_call.1} parent=1 // pred_check
      _
    $region3: #{tpu_custom_call.1} parent=1 // pred_check_branch
      %17 = sbr.rel (0) target = $region5
    $region4: #{tpu_custom_call.1} parent=1 // pred_region
      _
    $region5: #{tpu_custom_call.1} parent=1 // pred_fallthru
      _
    // Predicated region
    $region6: #{tpu_custom_call.1} parent=1 // pred_check
      _
    $region7: #{tpu_custom_call.1} parent=1 // pred_check_branch
      %19 = sbr.rel (0) target = $region9
    $region8: #{tpu_custom_call.1} parent=1 // pred_region
      _
    $region9: #{tpu_custom_call.1} parent=1 // pred_fallthru
      _
    // Predicated region
    $region10: #{tpu_custom_call.1} parent=1 // pred_check
      _
    $region11: #{tpu_custom_call.1} parent=1 // pred_check_branch
      %21 = sbr.rel (0) target = $region13
    $region12: #{tpu_custom_call.1} parent=1 // pred_region
      _
    $region13: #{tpu_custom_call.1} parent=1 // pred_fallthru
      _
    // Predicated region
    $region14: #{tpu_custom_call.1} parent=1 // pred_check
      _
    $region15: #{tpu_custom_call.1} parent=1 // pred_check_branch
      %23 = sbr.rel (0) target = $region17
    $region16: #{tpu_custom_call.1} parent=1 // pred_region
      %s25 = ssub.s32 1024, 1024
      %26 = vsyncadd [#allocation3], %s25
      %s27 = sshll.u32 [#allocation2], 4
      %s28 = int_to_ptr.vmem [resolvable:$true] %s27
      %33 = dma.hbm_to_vmem [thread:$0]  %s3, 1024, %s28, [#allocation3], 64, 64, 4
    $region17: #{tpu_custom_call.1} parent=1 // pred_fallthru
      _
    // Predicated region
    $region18: #{tpu_custom_call.1} parent=1 // pred_check
      _
    $region19: #{tpu_custom_call.1} parent=1 // pred_check_branch
      %35 = sbr.rel (0) target = $region21
    $region20: #{tpu_custom_call.1} parent=1 // pred_region
      _
    $region21: #{tpu_custom_call.1} parent=1 // pred_fallthru
      _
    // Predicated region
    $region22: #{tpu_custom_call.1} parent=1 // pred_check
      _
    $region23: #{tpu_custom_call.1} parent=1 // pred_check_branch
      %37 = sbr.rel (0) target = $region25
    $region24: #{tpu_custom_call.1} parent=1 // pred_region
      %s39 = ssub.s32 1024, 1024
      %40 = vsyncadd [#allocation6], %s39
      %s41 = sshll.u32 [#allocation5], 4
      %s42 = int_to_ptr.vmem [resolvable:$true] %s41
      %47 = dma.hbm_to_vmem [thread:$0]  %s5, 1024, %s42, [#allocation6], 64, 64, 4
    $region25: #{tpu_custom_call.1} parent=1 // pred_fallthru
      _
    // Predicated region
    $region26: #{tpu_custom_call.1} parent=1 // pred_check
      _
    $region27: #{tpu_custom_call.1} parent=1 // pred_check_branch
      %49 = sbr.rel (0) target = $region29
    $region28: #{tpu_custom_call.1} parent=1 // pred_region
      _
    $region29: #{tpu_custom_call.1} parent=1 // pred_fallthru
      _
    // Predicated region
    $region30: #{tpu_custom_call.1} parent=1 // pred_check
      _
    $region31: #{tpu_custom_call.1} parent=1 // pred_check_branch
      %51 = sbr.rel (0) target = $region33
    $region32: #{tpu_custom_call.1} parent=1 // pred_region
      _
    $region33: #{tpu_custom_call.1} parent=1 // pred_fallthru
      _
    // Predicated region
    $region34: #{tpu_custom_call.1} parent=1 // pred_check
      _
    $region35: #{tpu_custom_call.1} parent=1 // pred_check_branch
      %53 = sbr.rel (0) target = $region37
    $region36: #{tpu_custom_call.1} parent=1 // pred_region
      %54 = dma.done [#allocation3], 1024
    $region37: #{tpu_custom_call.1} parent=1 // pred_fallthru
      _
    // Predicated region
    $region38: #{tpu_custom_call.1} parent=1 // pred_check
      _
    $region39: #{tpu_custom_call.1} parent=1 // pred_check_branch
      %56 = sbr.rel (0) target = $region41
    $region40: #{tpu_custom_call.1} parent=1 // pred_region
      %57 = dma.done [#allocation6], 1024
    $region41: #{tpu_custom_call.1} parent=1 // pred_fallthru
      _
    %v59 = vld [vmem:[%s0] sm:$0xf]
    %v60 = vld [vmem:[%s0 + $0x4] sm:$0xf]
    %v61 = vld [vmem:[%s1] sm:$0xf]
    %v62 = vld [vmem:[%s1 + $0x4] sm:$0xf]
    %v63 = vld [vmem:[%s2] sm:$0x1]
    %v65 = vlaneseq
    %v66 = vshrl.u32 %v65, 7
    %v67 = vsub.s32 0, %v66
    %v68 = vrot.slane %v63, %v67
    %v72 = vunpack.c.l.b16 %v59
    %v73 = vunpack.c.l.b16 %v60
    %v74 = vpack.c.b16 %v73, %v72
    %v77 = vunpack.c.l.b16 %v61
    %v78 = vunpack.c.l.b16 %v62
    %v79 = vpack.c.b16 %v78, %v77
    %vm81 = vcmask 130048
    %v83 = vsel %vm81, %v74, 0
    %85 = vmatprep.subr.bf16.mxu0 0
    %86 = vmatpush1.bf16.msra.mxu0 %v79
    %87 = vmatprep.subr.bf16.mxu0 0
    %88 = vmatpush1.bf16.msra.mxu0 0
    %89 = vmatprep.subr.bf16.mxu0 0
    %90 = vmatpush1.bf16.msra.mxu0 0
    %91 = vmatprep.subr.bf16.mxu0 0
    %92 = vmatpush1.bf16.msra.mxu0 0
    %93 = vmatprep.subr.bf16.mxu0 0
    %94 = vmatpush1.bf16.msra.mxu0 0
    %95 = vmatprep.subr.bf16.mxu0 0
    %96 = vmatpush1.bf16.msra.mxu0 0
    %97 = vmatprep.subr.bf16.mxu0 0
    %98 = vmatpush1.bf16.msra.mxu0 0
    %99 = vmatprep.subr.bf16.mxu0 0
    %100 = vmatpush1.bf16.msra.mxu0 0
    %101 = vmatprep.subr.bf16.mxu0 0
    %102 = vmatpush1.bf16.msra.mxu0 0
    %103 = vmatprep.subr.bf16.mxu0 0
    %104 = vmatpush1.bf16.msra.mxu0 0
    %105 = vmatprep.subr.bf16.mxu0 0
    %106 = vmatpush1.bf16.msra.mxu0 0
    %107 = vmatprep.subr.bf16.mxu0 0
    %108 = vmatpush1.bf16.msra.mxu0 0
    %109 = vmatprep.subr.bf16.mxu0 0
    %110 = vmatpush1.bf16.msra.mxu0 0
    %111 = vmatprep.subr.bf16.mxu0 0
    %112 = vmatpush1.bf16.msra.mxu0 0
    %113 = vmatprep.subr.bf16.mxu0 0
    %114 = vmatpush1.bf16.msra.mxu0 0
    %115 = vmatprep.subr.bf16.mxu0 0
    %116 = vmatpush1.bf16.msra.mxu0 0
    %117 = vmatprep.mubr.bf16.mxu0 0
    %118 = vmatmul.mubr.bf16.gmra.mrb[0].mxu0 %v83
    %v119 = vpop.f32.mrb[0].mxu0
    %v120 = vadd.f32 %v68, %v119
    %v121 = vpop.f32.mrb[0].mxu0
    %v122 = vpop.f32.mrb[0].mxu0
    %v123 = vadd.f32 %v68, %v122
    %v124 = vpop.f32.mrb[0].mxu0
    %125 = vdwg.mxu0
    %v126 = vmax.f32 %v120, 0.0
    %v127 = vmax.f32 %v123, 0.0
    %v128 = vpack.c.bf16 %v127, %v126
    %v129 = vld [vmem:[#allocation2] sm:$0xf]
    %v130 = vld [vmem:[#allocation2 + $0x4] sm:$0xf]
    %v131 = vld [vmem:[#allocation2 + $0x8] sm:$0xf]
    %v132 = vld [vmem:[#allocation2 + $0xc] sm:$0xf]
    %v133 = vld [vmem:[#allocation2 + $0x10] sm:$0xf]
    %v134 = vld [vmem:[#allocation2 + $0x14] sm:$0xf]
    %v135 = vld [vmem:[#allocation2 + $0x18] sm:$0xf]
    %v136 = vld [vmem:[#allocation2 + $0x1c] sm:$0xf]
    %v137 = vld [vmem:[#allocation2 + $0x20] sm:$0xf]
    %v138 = vld [vmem:[#allocation2 + $0x24] sm:$0xf]
    %v139 = vld [vmem:[#allocation2 + $0x28] sm:$0xf]
    %v140 = vld [vmem:[#allocation2 + $0x2c] sm:$0xf]
    %v141 = vld [vmem:[#allocation2 + $0x30] sm:$0xf]
    %v142 = vld [vmem:[#allocation2 + $0x34] sm:$0xf]
    %v143 = vld [vmem:[#allocation2 + $0x38] sm:$0xf]
    %v144 = vld [vmem:[#allocation2 + $0x3c] sm:$0xf]
    %v145 = vld [vmem:[%s4] sm:$0x1]
    %v147 = vlaneseq
    %v148 = vshrl.u32 %v147, 7
    %v149 = vsub.s32 0, %v148
    %v150 = vrot.slane %v145, %v149
    %v168 = vunpack.c.l.b16 %v129
    %v169 = vunpack.c.l.b16 %v130
    %v170 = vunpack.c.l.b16 %v131
    %v171 = vunpack.c.l.b16 %v132
    %v172 = vunpack.c.l.b16 %v133
    %v173 = vunpack.c.l.b16 %v134
    %v174 = vunpack.c.l.b16 %v135
    %v175 = vunpack.c.l.b16 %v136
    %v176 = vunpack.c.l.b16 %v137
    %v177 = vunpack.c.l.b16 %v138
    %v178 = vunpack.c.l.b16 %v139
    %v179 = vunpack.c.l.b16 %v140
    %v180 = vunpack.c.l.b16 %v141
    %v181 = vunpack.c.l.b16 %v142
    %v182 = vunpack.c.l.b16 %v143
    %v183 = vunpack.c.l.b16 %v144
    %v184 = vpack.c.b16 %v169, %v168
    %v185 = vpack.c.b16 %v171, %v170
    %v186 = vpack.c.b16 %v173, %v172
    %v187 = vpack.c.b16 %v175, %v174
    %v188 = vpack.c.b16 %v177, %v176
    %v189 = vpack.c.b16 %v179, %v178
    %v190 = vpack.c.b16 %v181, %v180
    %v191 = vpack.c.b16 %v183, %v182
    %200 = vmatprep.subr.bf16.mxu0 0
    %201 = vmatpush1.bf16.msra.mxu0 %v184
    %202 = vmatprep.subr.bf16.mxu0 0
    %203 = vmatpush1.bf16.msra.mxu0 %v185
    %204 = vmatprep.subr.bf16.mxu0 0
    %205 = vmatpush1.bf16.msra.mxu0 %v186
    %206 = vmatprep.subr.bf16.mxu0 0
    %207 = vmatpush1.bf16.msra.mxu0 %v187
    %208 = vmatprep.subr.bf16.mxu0 0
    %209 = vmatpush1.bf16.msra.mxu0 %v188
    %210 = vmatprep.subr.bf16.mxu0 0
    %211 = vmatpush1.bf16.msra.mxu0 %v189
    %212 = vmatprep.subr.bf16.mxu0 0
    %213 = vmatpush1.bf16.msra.mxu0 %v190
    %214 = vmatprep.subr.bf16.mxu0 0
    %215 = vmatpush1.bf16.msra.mxu0 %v191
    %216 = vmatprep.subr.bf16.mxu0 0
    %217 = vmatpush1.bf16.msra.mxu0 0
    %218 = vmatprep.subr.bf16.mxu0 0
    %219 = vmatpush1.bf16.msra.mxu0 0
    %220 = vmatprep.subr.bf16.mxu0 0
    %221 = vmatpush1.bf16.msra.mxu0 0
    %222 = vmatprep.subr.bf16.mxu0 0
    %223 = vmatpush1.bf16.msra.mxu0 0
    %224 = vmatprep.subr.bf16.mxu0 0
    %225 = vmatpush1.bf16.msra.mxu0 0
    %226 = vmatprep.subr.bf16.mxu0 0
    %227 = vmatpush1.bf16.msra.mxu0 0
    %228 = vmatprep.subr.bf16.mxu0 0
    %229 = vmatpush1.bf16.msra.mxu0 0
    %230 = vmatprep.subr.bf16.mxu0 0
    %231 = vmatpush1.bf16.msra.mxu0 0
    %232 = vmatprep.mubr.bf16.mxu0 0
    %233 = vmatmul.mubr.bf16.gmra.mrb[0].mxu0 %v128
    %v234 = vpop.f32.mrb[0].mxu0
    %v235 = vadd.f32 %v150, %v234
    %v236 = vpop.f32.mrb[0].mxu0
    %v237 = vpop.f32.mrb[0].mxu0
    %v238 = vadd.f32 %v150, %v237
    %v239 = vpop.f32.mrb[0].mxu0
    %240 = vdwg.mxu0
    %v241 = vmax.f32 %v235, 0.0
    %v242 = vmax.f32 %v238, 0.0
    %v243 = vpack.c.bf16 %v242, %v241
    %v244 = vld [vmem:[#allocation5] sm:$0xf]
    %v245 = vld [vmem:[#allocation5 + $0x4] sm:$0xf]
    %v246 = vld [vmem:[#allocation5 + $0x8] sm:$0xf]
    %v247 = vld [vmem:[#allocation5 + $0xc] sm:$0xf]
    %v248 = vld [vmem:[#allocation5 + $0x10] sm:$0xf]
    %v249 = vld [vmem:[#allocation5 + $0x14] sm:$0xf]
    %v250 = vld [vmem:[#allocation5 + $0x18] sm:$0xf]
    %v251 = vld [vmem:[#allocation5 + $0x1c] sm:$0xf]
    %v252 = vld [vmem:[#allocation5 + $0x20] sm:$0xf]
    %v253 = vld [vmem:[#allocation5 + $0x24] sm:$0xf]
    %v254 = vld [vmem:[#allocation5 + $0x28] sm:$0xf]
    %v255 = vld [vmem:[#allocation5 + $0x2c] sm:$0xf]
    %v256 = vld [vmem:[#allocation5 + $0x30] sm:$0xf]
    %v257 = vld [vmem:[#allocation5 + $0x34] sm:$0xf]
    %v258 = vld [vmem:[#allocation5 + $0x38] sm:$0xf]
    %v259 = vld [vmem:[#allocation5 + $0x3c] sm:$0xf]
    %v260 = vld [vmem:[%s6] sm:$0x1]
    %v262 = vlaneseq
    %v263 = vshrl.u32 %v262, 7
    %v264 = vsub.s32 0, %v263
    %v265 = vrot.slane %v260, %v264
    %v283 = vunpack.c.l.b16 %v244
    %v284 = vunpack.c.l.b16 %v245
    %v285 = vunpack.c.l.b16 %v246
    %v286 = vunpack.c.l.b16 %v247
    %v287 = vunpack.c.l.b16 %v248
    %v288 = vunpack.c.l.b16 %v249
    %v289 = vunpack.c.l.b16 %v250
    %v290 = vunpack.c.l.b16 %v251
    %v291 = vunpack.c.l.b16 %v252
    %v292 = vunpack.c.l.b16 %v253
    %v293 = vunpack.c.l.b16 %v254
    %v294 = vunpack.c.l.b16 %v255
    %v295 = vunpack.c.l.b16 %v256
    %v296 = vunpack.c.l.b16 %v257
    %v297 = vunpack.c.l.b16 %v258
    %v298 = vunpack.c.l.b16 %v259
    %v299 = vpack.c.b16 %v284, %v283
    %v300 = vpack.c.b16 %v286, %v285
    %v301 = vpack.c.b16 %v288, %v287
    %v302 = vpack.c.b16 %v290, %v289
    %v303 = vpack.c.b16 %v292, %v291
    %v304 = vpack.c.b16 %v294, %v293
    %v305 = vpack.c.b16 %v296, %v295
    %v306 = vpack.c.b16 %v298, %v297
    %315 = vmatprep.subr.bf16.mxu0 0
    %316 = vmatpush1.bf16.msra.mxu0 %v299
    %317 = vmatprep.subr.bf16.mxu0 0
    %318 = vmatpush1.bf16.msra.mxu0 %v300
    %319 = vmatprep.subr.bf16.mxu0 0
    %320 = vmatpush1.bf16.msra.mxu0 %v301
    %321 = vmatprep.subr.bf16.mxu0 0
    %322 = vmatpush1.bf16.msra.mxu0 %v302
    %323 = vmatprep.subr.bf16.mxu0 0
    %324 = vmatpush1.bf16.msra.mxu0 %v303
    %325 = vmatprep.subr.bf16.mxu0 0
    %326 = vmatpush1.bf16.msra.mxu0 %v304
    %327 = vmatprep.subr.bf16.mxu0 0
    %328 = vmatpush1.bf16.msra.mxu0 %v305
    %329 = vmatprep.subr.bf16.mxu0 0
    %330 = vmatpush1.bf16.msra.mxu0 %v306
    %331 = vmatprep.subr.bf16.mxu0 0
    %332 = vmatpush1.bf16.msra.mxu0 0
    %333 = vmatprep.subr.bf16.mxu0 0
    %334 = vmatpush1.bf16.msra.mxu0 0
    %335 = vmatprep.subr.bf16.mxu0 0
    %336 = vmatpush1.bf16.msra.mxu0 0
    %337 = vmatprep.subr.bf16.mxu0 0
    %338 = vmatpush1.bf16.msra.mxu0 0
    %339 = vmatprep.subr.bf16.mxu0 0
    %340 = vmatpush1.bf16.msra.mxu0 0
    %341 = vmatprep.subr.bf16.mxu0 0
    %342 = vmatpush1.bf16.msra.mxu0 0
    %343 = vmatprep.subr.bf16.mxu0 0
    %344 = vmatpush1.bf16.msra.mxu0 0
    %345 = vmatprep.subr.bf16.mxu0 0
    %346 = vmatpush1.bf16.msra.mxu0 0
    %347 = vmatprep.mubr.bf16.mxu0 0
    %348 = vmatmul.mubr.bf16.gmra.mrb[0].mxu0 %v243
    %v349 = vpop.f32.mrb[0].mxu0
    %v350 = vadd.f32 %v265, %v349
    %v351 = vpop.f32.mrb[0].mxu0
    %v352 = vpop.f32.mrb[0].mxu0
    %v353 = vadd.f32 %v265, %v352
    %v354 = vpop.f32.mrb[0].mxu0
    %355 = vdwg.mxu0
    %v356 = vlaneseq
    %v357 = vand.u32 %v356, 127
    %vm358 = vcmp.ge.s32.totalorder %v357, 14
    %vm359 = vcmp.lt.s32.totalorder %v357, 26
    %vm360 = vmand %vm358, %vm359
    %v361 = vmax.f32 %v350, -20.0
    %v362 = vmax.f32 %v353, -20.0
    %v363 = vmin.f32 %v361, 2.0
    %v364 = vmin.f32 %v362, 2.0
    %v365 = vsel %vm360, %v363, %v350
    %v366 = vsel %vm360, %v364, %v353
    %v367 = vld [vmem:[%s7] sm:$0xff]
    %v368 = vld [vmem:[%s7 + $0x8] sm:$0xff]
    %v369 = vadd.f32 %v365, %v367
    %v370 = vadd.f32 %v366, %v368
    %vm371 = vcmask 15360
    %v372 = vsel %vm371, %v369, -inf
    %373 = vmax.xlane.f32.xlu0 %v372
    %v374 = vpop.xlane.xlu0 %373
    %v375 = vsel %vm371, %v370, -inf
    %376 = vmax.xlane.f32.xlu0 %v375
    %v377 = vpop.xlane.xlu0 %376
    %vm378 = vcmp.ge.f32.partialorder %v369, %v374
    %vm379 = vcmp.ge.f32.partialorder %v370, %v377
    %v380 = vsel %vm378, %v357, 2
    %v381 = vsel %vm379, %v357, 2
    %v382 = vsel %vm371, %v380, 2147483647
    %v383 = vand.u32 %v382, 65535
    %v384 = vshra.s32 %v382, 16
    %v385 = vcvt.s32.f32 %v383
    %v386 = vcvt.s32.f32 %v384
    %387 = vmin.xlane.f32.xlu0 %v386
    %v388 = vpop.xlane.xlu0 %387
    %vm389 = vcmp.eq.f32.partialorder %v386, %v388
    %v390 = vsel %vm389, %v385, inf
    %391 = vmin.xlane.f32.xlu0 %v390
    %v392 = vpop.xlane.xlu0 %391
    %v393 = vcvt.f32.s32 %v392
    %v394 = vcvt.f32.s32 %v388
    %v395 = vshll.u32 %v394, 16
    %v396 = vadd.s32 %v395, %v393
    %v397 = vsel %vm371, %v381, 2147483647
    %v398 = vand.u32 %v397, 65535
    %v399 = vshra.s32 %v397, 16
    %v400 = vcvt.s32.f32 %v398
    %v401 = vcvt.s32.f32 %v399
    %402 = vmin.xlane.f32.xlu0 %v401
    %v403 = vpop.xlane.xlu0 %402
    %vm404 = vcmp.eq.f32.partialorder %v401, %v403
    %v405 = vsel %vm404, %v400, inf
    %406 = vmin.xlane.f32.xlu0 %v405
    %v407 = vpop.xlane.xlu0 %406
    %v408 = vcvt.f32.s32 %v407
    %v409 = vcvt.f32.s32 %v403
    %v410 = vshll.u32 %v409, 16
    %v411 = vadd.s32 %v410, %v408
    %vm412 = vcmp.eq.s32.totalorder %v357, %v396
    %vm413 = vcmp.eq.s32.totalorder %v357, %v411
    %v414 = vsel %vm412, 1, 0
    %v415 = vsel %vm413, 1, 0
    %v416 = vcvt.s32.f32 %v414
    %v417 = vcvt.s32.f32 %v415
    %419 = vset.pattern.permute.xlu0 0
    %420 = vperm.xlu0 %419, %v416
    %v421 = vpop.permute.xlu0 %420
    %424 = vset.pattern.permute.xlu0 0
    %425 = vperm.xlu0 %424, %v417
    %v426 = vpop.permute.xlu0 %425
    %v428 = vmul.f32 %v421, %v365
    %v429 = vmul.f32 %v426, %v366
    %v430 = vadd.f32 %v428, 0.0
    %v431 = vadd.f32 %v429, 0.0
    %432 = vset.pattern.permute.xlu0 1
    %433 = vperm.xlu0 %432, %v416
    %v434 = vpop.permute.xlu0 %433
    %436 = vset.pattern.permute.xlu0 1
    %437 = vperm.xlu0 %436, %v417
    %v438 = vpop.permute.xlu0 %437
    %v440 = vmul.f32 %v434, %v365
    %v441 = vmul.f32 %v438, %v366
    %444 = vrot.lane.b32.xlu0 %v440, 122
    %v445 = vpop.permute.xlu0 %444
    %446 = vrot.lane.b32.xlu0 %v441, 122
    %v447 = vpop.permute.xlu0 %446
    %v450 = vadd.f32 %v430, %v445
    %v451 = vadd.f32 %v431, %v447
    %v452 = vmul.f32 %v450, 1.442695
    %v453 = vpow.pop %v452
    %v454 = vmul.f32 %v451, 1.442695
    %v455 = vpow.pop %v454
    %458 = vrot.lane.b32.xlu0 %v367, 12
    %v459 = vpop.permute.xlu0 %458
    %460 = vrot.lane.b32.xlu0 %v368, 12
    %v461 = vpop.permute.xlu0 %460
    %v464 = vmul.f32 %v453, %v459
    %v465 = vmul.f32 %v455, %v461
    %468 = vrot.lane.b32.xlu0 %v464, 116
    %v469 = vpop.permute.xlu0 %468
    %470 = vrot.lane.b32.xlu0 %v465, 116
    %v471 = vpop.permute.xlu0 %470
    %v474 = vadd.f32 %v450, %v469
    %v475 = vadd.f32 %v451, %v471
    %478 = vrot.lane.b32.xlu0 %v474, 126
    %v479 = vpop.permute.xlu0 %478
    %480 = vrot.lane.b32.xlu0 %v475, 126
    %v481 = vpop.permute.xlu0 %480
    %484 = vrot.lane.b32.xlu0 %v474, 4
    %v485 = vpop.permute.xlu0 %484
    %486 = vrot.lane.b32.xlu0 %v475, 4
    %v487 = vpop.permute.xlu0 %486
    %vm490 = vcmask 48128
    %v491 = vsel %vm490, %v479, %v485
    %v492 = vsel %vm490, %v481, %v487
    %495 = vrot.lane.b32.xlu0 %v365, 126
    %v496 = vpop.permute.xlu0 %495
    %497 = vrot.lane.b32.xlu0 %v366, 126
    %v498 = vpop.permute.xlu0 %497
    %v501 = vsub.f32 %v491, %v496
    %v502 = vsub.f32 %v492, %v498
    %v503 = vsub.f32 0.0, %v365
    %v504 = vsub.f32 0.0, %v366
    %v505 = vmul.f32 %v503, 1.442695
    %v506 = vpow.pop %v505
    %v507 = vmul.f32 %v504, 1.442695
    %v508 = vpow.pop %v507
    %511 = vrot.lane.b32.xlu0 %v506, 114
    %v512 = vpop.permute.xlu0 %511
    %513 = vrot.lane.b32.xlu0 %v508, 114
    %v514 = vpop.permute.xlu0 %513
    %v517 = vmul.f32 %v501, %v512
    %v518 = vmul.f32 %v502, %v514
    %v519 = vlaneseq
    %v520 = vshrl.u32 %v519, 7
    %v521 = vadd.s32 %v520, 8
    %v522 = vmul.u32 %v357, 6
    %vm523 = vcmp.ge.s32.totalorder %v520, %v522
    %vm524 = vcmp.ge.s32.totalorder %v521, %v522
    %v525 = vadd.s32 %v357, 1
    %v526 = vmul.u32 %v525, 6
    %vm527 = vcmp.lt.s32.totalorder %v520, %v526
    %vm528 = vcmp.lt.s32.totalorder %v521, %v526
    %vm529 = vmand %vm523, %vm527
    %vm530 = vmand %vm524, %vm528
    %v531 = vsel %vm529, 1, 0
    %v532 = vsel %vm530, 1, 0
    %v533 = vcvt.s32.f32 %v531
    %v534 = vcvt.s32.f32 %v532
    %v535 = vmul.f32 %v517, %v517
    %v536 = vmul.f32 %v518, %v518
    %vm537 = vcmask 97280
    %v539 = vsel %vm537, %v535, 0
    %v542 = vsel %vm537, %v536, 0
    %vm544 = vcmask 1043456
    %v546 = vsel %vm544, %v534, 0
    %548 = vmatprep.subr.mxu0 0.0
    %549 = vmatpush1.msra.mxu0 %v533
    %550 = vmatprep.subr.mxu0 0.0
    %551 = vmatpush1.msra.mxu0 %v546
    %552 = vmatprep.subr.mxu0 0.0
    %553 = vmatpush1.msra.mxu0 0.0
    %554 = vmatprep.subr.mxu0 0.0
    %555 = vmatpush1.msra.mxu0 0.0
    %556 = vmatprep.subr.mxu0 0.0
    %557 = vmatpush1.msra.mxu0 0.0
    %558 = vmatprep.subr.mxu0 0.0
    %559 = vmatpush1.msra.mxu0 0.0
    %560 = vmatprep.subr.mxu0 0.0
    %561 = vmatpush1.msra.mxu0 0.0
    %562 = vmatprep.subr.mxu0 0.0
    %563 = vmatpush1.msra.mxu0 0.0
    %564 = vmatprep.subr.mxu0 0.0
    %565 = vmatpush1.msra.mxu0 0.0
    %566 = vmatprep.subr.mxu0 0.0
    %567 = vmatpush1.msra.mxu0 0.0
    %568 = vmatprep.subr.mxu0 0.0
    %569 = vmatpush1.msra.mxu0 0.0
    %570 = vmatprep.subr.mxu0 0.0
    %571 = vmatpush1.msra.mxu0 0.0
    %572 = vmatprep.subr.mxu0 0.0
    %573 = vmatpush1.msra.mxu0 0.0
    %574 = vmatprep.subr.mxu0 0.0
    %575 = vmatpush1.msra.mxu0 0.0
    %576 = vmatprep.subr.mxu0 0.0
    %577 = vmatpush1.msra.mxu0 0.0
    %578 = vmatprep.subr.mxu0 0.0
    %579 = vmatpush1.msra.mxu0 0.0
    %580 = vmatprep.subr.mxu0 0.0
    %581 = vmatpush1.msra.mxu0 0.0
    %582 = vmatprep.subr.mxu0 0.0
    %583 = vmatpush1.msra.mxu0 0.0
    %584 = vmatprep.subr.mxu0 0.0
    %585 = vmatpush1.msra.mxu0 0.0
    %586 = vmatprep.subr.mxu0 0.0
    %587 = vmatpush1.msra.mxu0 0.0
    %588 = vmatprep.subr.mxu0 0.0
    %589 = vmatpush1.msra.mxu0 0.0
    %590 = vmatprep.subr.mxu0 0.0
    %591 = vmatpush1.msra.mxu0 0.0
    %592 = vmatprep.subr.mxu0 0.0
    %593 = vmatpush1.msra.mxu0 0.0
    %594 = vmatprep.subr.mxu0 0.0
    %595 = vmatpush1.msra.mxu0 0.0
    %596 = vmatprep.subr.mxu0 0.0
    %597 = vmatpush1.msra.mxu0 0.0
    %598 = vmatprep.subr.mxu0 0.0
    %599 = vmatpush1.msra.mxu0 0.0
    %600 = vmatprep.subr.mxu0 0.0
    %601 = vmatpush1.msra.mxu0 0.0
    %602 = vmatprep.subr.mxu0 0.0
    %603 = vmatpush1.msra.mxu0 0.0
    %604 = vmatprep.subr.mxu0 0.0
    %605 = vmatpush1.msra.mxu0 0.0
    %606 = vmatprep.subr.mxu0 0.0
    %607 = vmatpush1.msra.mxu0 0.0
    %608 = vmatprep.subr.mxu0 0.0
    %609 = vmatpush1.msra.mxu0 0.0
    %610 = vmatprep.subr.mxu0 0.0
    %611 = vmatpush1.msra.mxu0 0.0
    %612 = vmatprep.mubr.f32.mxu0 0.0
    %613 = vmatmul.mubr.f32.gmra.mrb[0].mxu0 %v539
    %v614 = vpop.f32.mrb[0].mxu0
    %v615 = vadd.f32 0.0, %v614
    %v616 = vpop.f32.mrb[0].mxu0
    %617 = vmatprep.mubr.f32.mxu0 0.0
    %618 = vmatmul.mubr.f32.gmra.mrb[0].mxu0 %v542
    %v619 = vpop.f32.mrb[0].mxu0
    %v620 = vadd.f32 0.0, %v619
    %v621 = vpop.f32.mrb[0].mxu0
    %622 = vdwg.mxu0
    %623 = vrot.lane.b32.xlu0 %v365, 114
    %v624 = vpop.permute.xlu0 %623
    %625 = vrot.lane.b32.xlu0 %v366, 114
    %v626 = vpop.permute.xlu0 %625
    %v627 = vsel %vm537, %v624, 0
    %v629 = vsel %vm537, %v626, 0
    %631 = vmatprep.subr.mxu0 0.0
    %632 = vmatpush1.msra.mxu0 %v533
    %633 = vmatprep.subr.mxu0 0.0
    %634 = vmatpush1.msra.mxu0 %v546
    %635 = vmatprep.subr.mxu0 0.0
    %636 = vmatpush1.msra.mxu0 0.0
    %637 = vmatprep.subr.mxu0 0.0
    %638 = vmatpush1.msra.mxu0 0.0
    %639 = vmatprep.subr.mxu0 0.0
    %640 = vmatpush1.msra.mxu0 0.0
    %641 = vmatprep.subr.mxu0 0.0
    %642 = vmatpush1.msra.mxu0 0.0
    %643 = vmatprep.subr.mxu0 0.0
    %644 = vmatpush1.msra.mxu0 0.0
    %645 = vmatprep.subr.mxu0 0.0
    %646 = vmatpush1.msra.mxu0 0.0
    %647 = vmatprep.subr.mxu0 0.0
    %648 = vmatpush1.msra.mxu0 0.0
    %649 = vmatprep.subr.mxu0 0.0
    %650 = vmatpush1.msra.mxu0 0.0
    %651 = vmatprep.subr.mxu0 0.0
    %652 = vmatpush1.msra.mxu0 0.0
    %653 = vmatprep.subr.mxu0 0.0
    %654 = vmatpush1.msra.mxu0 0.0
    %655 = vmatprep.subr.mxu0 0.0
    %656 = vmatpush1.msra.mxu0 0.0
    %657 = vmatprep.subr.mxu0 0.0
    %658 = vmatpush1.msra.mxu0 0.0
    %659 = vmatprep.subr.mxu0 0.0
    %660 = vmatpush1.msra.mxu0 0.0
    %661 = vmatprep.subr.mxu0 0.0
    %662 = vmatpush1.msra.mxu0 0.0
    %663 = vmatprep.subr.mxu0 0.0
    %664 = vmatpush1.msra.mxu0 0.0
    %665 = vmatprep.subr.mxu0 0.0
    %666 = vmatpush1.msra.mxu0 0.0
    %667 = vmatprep.subr.mxu0 0.0
    %668 = vmatpush1.msra.mxu0 0.0
    %669 = vmatprep.subr.mxu0 0.0
    %670 = vmatpush1.msra.mxu0 0.0
    %671 = vmatprep.subr.mxu0 0.0
    %672 = vmatpush1.msra.mxu0 0.0
    %673 = vmatprep.subr.mxu0 0.0
    %674 = vmatpush1.msra.mxu0 0.0
    %675 = vmatprep.subr.mxu0 0.0
    %676 = vmatpush1.msra.mxu0 0.0
    %677 = vmatprep.subr.mxu0 0.0
    %678 = vmatpush1.msra.mxu0 0.0
    %679 = vmatprep.subr.mxu0 0.0
    %680 = vmatpush1.msra.mxu0 0.0
    %681 = vmatprep.subr.mxu0 0.0
    %682 = vmatpush1.msra.mxu0 0.0
    %683 = vmatprep.subr.mxu0 0.0
    %684 = vmatpush1.msra.mxu0 0.0
    %685 = vmatprep.subr.mxu0 0.0
    %686 = vmatpush1.msra.mxu0 0.0
    %687 = vmatprep.subr.mxu0 0.0
    %688 = vmatpush1.msra.mxu0 0.0
    %689 = vmatprep.subr.mxu0 0.0
    %690 = vmatpush1.msra.mxu0 0.0
    %691 = vmatprep.subr.mxu0 0.0
    %692 = vmatpush1.msra.mxu0 0.0
    %693 = vmatprep.subr.mxu0 0.0
    %694 = vmatpush1.msra.mxu0 0.0
    %695 = vmatprep.mubr.f32.mxu0 0.0
    %696 = vmatmul.mubr.f32.gmra.mrb[0].mxu0 %v627
    %v697 = vpop.f32.mrb[0].mxu0
    %v698 = vadd.f32 0.0, %v697
    %v699 = vpop.f32.mrb[0].mxu0
    %700 = vmatprep.mubr.f32.mxu0 0.0
    %701 = vmatmul.mubr.f32.gmra.mrb[0].mxu0 %v629
    %v702 = vpop.f32.mrb[0].mxu0
    %v703 = vadd.f32 0.0, %v702
    %v704 = vpop.f32.mrb[0].mxu0
    %705 = vdwg.mxu0
    %v706 = vmul.f32 %v615, -0.5
    %v707 = vmul.f32 %v620, -0.5
    %v708 = vsub.f32 %v706, %v698
    %v709 = vsub.f32 %v707, %v703
    %v710 = vsub.f32 %v708, 5.5136313
    %v711 = vsub.f32 %v709, 5.5136313
    %v712 = vadd.f32 %v710, %v365
    %v713 = vadd.f32 %v711, %v366
    %v714 = vsel %vm371, %v712, -inf
    %715 = vmax.xlane.f32.xlu0 %v714
    %v716 = vpop.xlane.xlu0 %715
    %v717 = vsel %vm371, %v713, -inf
    %718 = vmax.xlane.f32.xlu0 %v717
    %v719 = vpop.xlane.xlu0 %718
    %v720 = vsub.f32 %v712, %v716
    %v721 = vsub.f32 %v713, %v719
    %v722 = vmul.f32 %v720, 1.442695
    %v723 = vpow.pop %v722
    %v724 = vmul.f32 %v721, 1.442695
    %v725 = vpow.pop %v724
    %v726 = vsel %vm371, %v723, 0.0
    %727 = vadd.xlane.f32.xlu0 %v726
    %v728 = vpop.xlane.xlu0 %727
    %v729 = vsel %vm371, %v725, 0.0
    %730 = vadd.xlane.f32.xlu0 %v729
    %v731 = vpop.xlane.xlu0 %730
    %v732 = vlog2.pop %v728
    %v733 = vmul.f32 %v732, 0.6931472
    %v734 = vlog2.pop %v731
    %v735 = vmul.f32 %v734, 0.6931472
    %v736 = vadd.f32 %v716, %v733
    %v737 = vadd.f32 %v719, %v735
    %v738 = vsel %vm371, %v365, -inf
    %739 = vmax.xlane.f32.xlu0 %v738
    %v740 = vpop.xlane.xlu0 %739
    %v741 = vsel %vm371, %v366, -inf
    %742 = vmax.xlane.f32.xlu0 %v741
    %v743 = vpop.xlane.xlu0 %742
    %v744 = vsub.f32 %v365, %v740
    %v745 = vsub.f32 %v366, %v743
    %v746 = vmul.f32 %v744, 1.442695
    %v747 = vpow.pop %v746
    %v748 = vmul.f32 %v745, 1.442695
    %v749 = vpow.pop %v748
    %v750 = vsel %vm371, %v747, 0.0
    %751 = vadd.xlane.f32.xlu0 %v750
    %v752 = vpop.xlane.xlu0 %751
    %v753 = vsel %vm371, %v749, 0.0
    %754 = vadd.xlane.f32.xlu0 %v753
    %v755 = vpop.xlane.xlu0 %754
    %v756 = vlog2.pop %v752
    %v757 = vmul.f32 %v756, 0.6931472
    %v758 = vlog2.pop %v755
    %v759 = vmul.f32 %v758, 0.6931472
    %v760 = vadd.f32 %v740, %v757
    %v761 = vadd.f32 %v743, %v759
    %v762 = vsub.f32 %v736, %v760
    %v763 = vsub.f32 %v737, %v761
    %v764 = vtanh.pop %v474
    %v765 = vtanh.pop %v475
    %v766 = vpack.c.bf16 %v763, %v762
    %v767 = vunpack.c.l.bf16 %v766
    %v768 = vunpack.c.h.bf16 %v766
    %v769 = vsub.f32 %v762, %v767
    %v770 = vsub.f32 %v763, %v768
    %v771 = vpack.c.bf16 %v770, %v769
    %v772 = vpack.c.bf16 %v366, %v365
    %v773 = vpack.c.bf16 %v765, %v764
    %v774 = vpack.c.bf16 %v475, %v474
    %776 = vrot.lane.b32.xlu0 %v773, 24
    %v777 = vpop.permute.xlu0 %776
    %779 = vrot.lane.b32.xlu0 %v774, 30
    %v780 = vpop.permute.xlu0 %779
    %vm781 = vcmask 211968
    %v784 = vsel %vm781, %v772, %v777
    %vm785 = vcmask 261120
    %v787 = vsel %vm785, %v784, %v780
    %vm788 = vcmask 310272
    %v790 = vsel %vm788, %v787, %v766
    %vm791 = vcmask 318464
    %v793 = vsel %vm791, %v790, %v771
    %vm794 = vcmask 326656
    %v796 = vsel %vm794, %v793, 0
    %v798 = vunpack.c.l.b16 %v796
    %v799 = vunpack.c.h.b16 %v796
    %v800 = vpack.c.b16 %v798, %v798
    %v801 = vpack.c.b16 %v799, %v799
    %804 = vst [vmem:[#allocation7] sm:$0xf] %v800
    %805 = vst [vmem:[#allocation7 + $0x4] sm:$0xf] %v801
    // Predicated region
    $region42: #{tpu_custom_call.1} parent=1 // pred_check
      _
    $region43: #{tpu_custom_call.1} parent=1 // pred_check_branch
      %807 = sbr.rel (0) target = $region45
    $region44: #{tpu_custom_call.1} parent=1 // pred_region
      %s809 = ssub.s32 128, 128
      %810 = vsyncadd [#allocation4], %s809
      %s811 = sshll.u32 [#allocation7], 4
      %s812 = int_to_ptr.vmem [resolvable:$true] %s811
      %817 = dma.vmem_to_hbm [thread:$0]  %s812, 128, %s8, [#allocation4], 64, 64, 4
    $region45: #{tpu_custom_call.1} parent=1 // pred_fallthru
      _
    // Predicated region
    $region46: #{tpu_custom_call.1} parent=1 // pred_check
      _
    $region47: #{tpu_custom_call.1} parent=1 // pred_check_branch
      %819 = sbr.rel (0) target = $region49
    $region48: #{tpu_custom_call.1} parent=1 // pred_region
      %820 = dma.done [#allocation4], 128
    $region49: #{tpu_custom_call.1} parent=1 // pred_fallthru
      _
    %821 = vsyncpa [#allocation3], 1
    %822 = vsyncpa [#allocation6], 1
    %823 = vsyncpa [#allocation4], 1

</llo_original>
